<compile_context>
chip_gen: v5e
topology: v5e:2x2
jax: 0.10.0
libtpu: 0.0.40
codegen_flags: <defaults>
</compile_context>

<pallas_src>
import jax
import jax.numpy as jnp
from jax.experimental import pallas as pl
from jax.experimental.pallas import tpu as pltpu


_EPS = 1e-5
_N_PAD = 128  # lane-dense output width (multiple of 128)


def _bn_train_onepass(h, gamma, beta, inv_b):
    """Training-mode BatchNorm, single pass over h (sum + sum of squares)."""
    mu = jnp.sum(h, axis=0, keepdims=True) * inv_b
    ex2 = jnp.sum(h * h, axis=0, keepdims=True) * inv_b
    var = jnp.maximum(ex2 - mu * mu, 0.0)  # biased variance, clamp rounding
    scale = jax.lax.rsqrt(var + _EPS) * gamma
    return (h - mu) * scale + beta


def qnetwork_kernel(x_ref, w1_ref, w2_ref, w3_ref, w4_ref, vec_ref, out_ref):
    B = x_ref.shape[0]
    H1 = w1_ref.shape[1]
    H2 = w2_ref.shape[1]
    H3 = w3_ref.shape[1]
    inv_b = 1.0 / B  # static

    # Packed vector params: rows are [b1, g1, be1, b2, g2, be2, b3, b4_pad],
    # each zero-padded to 128 lanes.  Single (8,128) load.
    vec = vec_ref[...]
    b1, g1, be1 = vec[0:1, :H1], vec[1:2, :H1], vec[2:3, :H1]
    b2, g2, be2 = vec[3:4, :H2], vec[4:5, :H2], vec[5:6, :H2]
    b3 = vec[6:7, :H3]
    b4 = vec[7:8, :]  # (1, 128), zero-padded past action_size

    x = x_ref[...]

    # fc1 -> ReLU -> BN1
    h = jnp.dot(x, w1_ref[...], preferred_element_type=jnp.float32) + b1
    h = jnp.maximum(h, 0.0)
    h = _bn_train_onepass(h, g1, be1, inv_b)

    # fc2 -> ReLU -> BN2
    h = jnp.dot(h, w2_ref[...], preferred_element_type=jnp.float32) + b2
    h = jnp.maximum(h, 0.0)
    h = _bn_train_onepass(h, g2, be2, inv_b)

    # fc3 -> ReLU
    h = jnp.dot(h, w3_ref[...], preferred_element_type=jnp.float32) + b3
    h = jnp.maximum(h, 0.0)

    # fc4 (no activation) -> lane-dense (B, 128) store (w4/b4 zero-padded)
    out_ref[...] = (
        jnp.dot(h, w4_ref[...], preferred_element_type=jnp.float32) + b4
    ).astype(out_ref.dtype)


def init_qnetwork_params(key, state_size, action_size,
                         fc1_units=64, fc2_units=64, fc3_units=64):
    """PyTorch nn.Linear-style init: U(-1/sqrt(fan_in), 1/sqrt(fan_in)).
    Weights stored (in_features, out_features). BN gamma=1, beta=0."""
    dims = [(state_size, fc1_units), (fc1_units, fc2_units),
            (fc2_units, fc3_units), (fc3_units, action_size)]
    params = {}
    keys = jax.random.split(key, 8)
    for i, (fan_in, fan_out) in enumerate(dims, start=1):
        bound = 1.0 / (fan_in ** 0.5)
        params[f"w{i}"] = jax.random.uniform(
            keys[2 * (i - 1)], (fan_in, fan_out), jnp.float32, -bound, bound)
        params[f"b{i}"] = jax.random.uniform(
            keys[2 * (i - 1) + 1], (1, fan_out), jnp.float32, -bound, bound)
    params["g1"] = jnp.ones((1, fc1_units), jnp.float32)
    params["be1"] = jnp.zeros((1, fc1_units), jnp.float32)
    params["g2"] = jnp.ones((1, fc2_units), jnp.float32)
    params["be2"] = jnp.zeros((1, fc2_units), jnp.float32)
    return params


def prepare_qnetwork_params(params):
    """One-time packing for the kernel:
    - vector params coalesced into a single (8, 128) array
    - w4 zero-padded to 128 output lanes (lane-dense store)."""
    def _row(v):
        v = v.reshape(-1).astype(jnp.float32)
        return jnp.pad(v, (0, _N_PAD - v.shape[0]))

    vec = jnp.stack([
        _row(params["b1"]), _row(params["g1"]), _row(params["be1"]),
        _row(params["b2"]), _row(params["g2"]), _row(params["be2"]),
        _row(params["b3"]), _row(params["b4"]),
    ], axis=0)  # (8, 128)

    fc3_units, action_size = params["w4"].shape
    w4p = jnp.zeros((fc3_units, _N_PAD), jnp.float32)
    w4p = w4p.at[:, :action_size].set(params["w4"])

    return {
        "w1": params["w1"], "w2": params["w2"], "w3": params["w3"],
        "w4p": w4p, "vec": vec, "action_size": action_size,
    }


def qnetwork_forward(state, prepared):
    """state: (B, state_size) f32 -> (B, action_size) f32."""
    B = state.shape[0]
    action_size = prepared["action_size"]

    args = (state, prepared["w1"], prepared["w2"], prepared["w3"],
            prepared["w4p"], prepared["vec"])
    vmem_spec = pl.BlockSpec(memory_space=pltpu.MemorySpace.VMEM)

    out_padded = pl.pallas_call(
        qnetwork_kernel,
        out_shape=jax.ShapeDtypeStruct((B, _N_PAD), jnp.float32),
        in_specs=[vmem_spec] * len(args),
        out_specs=vmem_spec,
    )(*args)
    return out_padded[:, :action_size]


def _reference_forward(state, p):
    """Pure-JAX reference (two-pass BN, matches PyTorch training-mode BN)."""
    def bn(h, g, be):
        mu = jnp.mean(h, axis=0, keepdims=True)
        var = jnp.mean((h - mu) ** 2, axis=0, keepdims=True)
        return (h - mu) * jax.lax.rsqrt(var + _EPS) * g + be

    h = jnp.maximum(state @ p["w1"] + p["b1"], 0.0)
    h = bn(h, p["g1"], p["be1"])
    h = jnp.maximum(h @ p["w2"] + p["b2"], 0.0)
    h = bn(h, p["g2"], p["be2"])
    h = jnp.maximum(h @ p["w3"] + p["b3"], 0.0)
    return h @ p["w4"] + p["b4"]


if __name__ == "__main__":
    state_size = 8
    action_size = 4
    batch = 8

    key = jax.random.PRNGKey(0)
    k_params, k_state = jax.random.split(key)
    params = init_qnetwork_params(k_params, state_size, action_size)
    prepared = prepare_qnetwork_params(params)
    state = jax.random.normal(k_state, (batch, state_size), jnp.float32)

    out = qnetwork_forward(state, prepared)
    out = jax.block_until_ready(out)

    ref = _reference_forward(state, params)
    assert out.shape == (batch, action_size)
    assert jnp.allclose(out, ref, atol=1e-4, rtol=1e-4)

    print("KERNEL_OK")
</pallas_src>

<mosaic_0001>
module attributes {stable_mosaic.version = 11 : i64} {
  func.func @qnetwork_kernel(%arg0: memref<8x8xf32, #tpu.memory_space<vmem>>, %arg1: memref<8x64xf32, #tpu.memory_space<vmem>>, %arg2: memref<64x64xf32, #tpu.memory_space<vmem>>, %arg3: memref<64x64xf32, #tpu.memory_space<vmem>>, %arg4: memref<64x128xf32, #tpu.memory_space<vmem>>, %arg5: memref<8x128xf32, #tpu.memory_space<vmem>>, %arg6: memref<8x128xf32, #tpu.memory_space<vmem>>) attributes {dimension_semantics = [], scalar_prefetch = 0 : i64, scratch_operands = 0 : i64, tpu.core_type = #tpu.core_type<tc>} {
    %c0 = arith.constant 0 : index
    %c0_0 = arith.constant 0 : index
    %0 = vector.load %arg5[%c0, %c0_0] : memref<8x128xf32, #tpu.memory_space<vmem>>, vector<8x128xf32>
    %1 = vector.extract_strided_slice %0 {offsets = [0, 0], sizes = [1, 64], strides = [1, 1]} : vector<8x128xf32> to vector<1x64xf32>
    %2 = vector.extract_strided_slice %0 {offsets = [1, 0], sizes = [1, 64], strides = [1, 1]} : vector<8x128xf32> to vector<1x64xf32>
    %3 = vector.extract_strided_slice %0 {offsets = [2, 0], sizes = [1, 64], strides = [1, 1]} : vector<8x128xf32> to vector<1x64xf32>
    %4 = vector.extract_strided_slice %0 {offsets = [3, 0], sizes = [1, 64], strides = [1, 1]} : vector<8x128xf32> to vector<1x64xf32>
    %5 = vector.extract_strided_slice %0 {offsets = [4, 0], sizes = [1, 64], strides = [1, 1]} : vector<8x128xf32> to vector<1x64xf32>
    %6 = vector.extract_strided_slice %0 {offsets = [5, 0], sizes = [1, 64], strides = [1, 1]} : vector<8x128xf32> to vector<1x64xf32>
    %7 = vector.extract_strided_slice %0 {offsets = [6, 0], sizes = [1, 64], strides = [1, 1]} : vector<8x128xf32> to vector<1x64xf32>
    %8 = vector.extract_strided_slice %0 {offsets = [7, 0], sizes = [1, 128], strides = [1, 1]} : vector<8x128xf32> to vector<1x128xf32>
    %c0_1 = arith.constant 0 : index
    %c0_2 = arith.constant 0 : index
    %9 = vector.load %arg0[%c0_1, %c0_2] : memref<8x8xf32, #tpu.memory_space<vmem>>, vector<8x8xf32>
    %c0_3 = arith.constant 0 : index
    %c0_4 = arith.constant 0 : index
    %10 = vector.load %arg1[%c0_3, %c0_4] : memref<8x64xf32, #tpu.memory_space<vmem>>, vector<8x64xf32>
    %cst = arith.constant dense<0.000000e+00> : vector<8x64xf32>
    %11 = tpu.matmul %9, %10, %cst {dimension_numbers = #tpu.dot_dimension_numbers<[1], [0], [0], [1], [0, 0, 1, 1], [], []>} : vector<8x8xf32>, vector<8x64xf32>, vector<8x64xf32> -> vector<8x64xf32>
    %12 = vector.broadcast %1 : vector<1x64xf32> to vector<8x64xf32>
    %13 = arith.addf %11, %12 : vector<8x64xf32>
    %cst_5 = arith.constant 0.000000e+00 : f32
    %14 = vector.broadcast %cst_5 : f32 to vector<8x64xf32>
    %15 = arith.maximumf %13, %14 : vector<8x64xf32>
    %cst_6 = arith.constant dense<0.000000e+00> : vector<64xf32>
    %16 = vector.multi_reduction <add>, %15, %cst_6 [0] : vector<8x64xf32> to vector<64xf32>
    %17 = vector.shape_cast %16 : vector<64xf32> to vector<1x64xf32>
    %cst_7 = arith.constant 1.250000e-01 : f32
    %18 = vector.broadcast %cst_7 : f32 to vector<1x64xf32>
    %19 = arith.mulf %17, %18 : vector<1x64xf32>
    %20 = arith.mulf %15, %15 : vector<8x64xf32>
    %cst_8 = arith.constant dense<0.000000e+00> : vector<64xf32>
    %21 = vector.multi_reduction <add>, %20, %cst_8 [0] : vector<8x64xf32> to vector<64xf32>
    %22 = vector.shape_cast %21 : vector<64xf32> to vector<1x64xf32>
    %cst_9 = arith.constant 1.250000e-01 : f32
    %23 = vector.broadcast %cst_9 : f32 to vector<1x64xf32>
    %24 = arith.mulf %22, %23 : vector<1x64xf32>
    %25 = arith.mulf %19, %19 : vector<1x64xf32>
    %26 = arith.subf %24, %25 : vector<1x64xf32>
    %cst_10 = arith.constant 0.000000e+00 : f32
    %27 = vector.broadcast %cst_10 : f32 to vector<1x64xf32>
    %28 = arith.maximumf %26, %27 : vector<1x64xf32>
    %cst_11 = arith.constant 9.99999974E-6 : f32
    %29 = vector.broadcast %cst_11 : f32 to vector<1x64xf32>
    %30 = arith.addf %28, %29 : vector<1x64xf32>
    %31 = math.rsqrt %30 : vector<1x64xf32>
    %32 = arith.mulf %31, %2 : vector<1x64xf32>
    %33 = vector.broadcast %19 : vector<1x64xf32> to vector<8x64xf32>
    %34 = arith.subf %15, %33 : vector<8x64xf32>
    %35 = vector.broadcast %32 : vector<1x64xf32> to vector<8x64xf32>
    %36 = arith.mulf %34, %35 : vector<8x64xf32>
    %37 = vector.broadcast %3 : vector<1x64xf32> to vector<8x64xf32>
    %38 = arith.addf %36, %37 : vector<8x64xf32>
    %c0_12 = arith.constant 0 : index
    %c0_13 = arith.constant 0 : index
    %39 = vector.load %arg2[%c0_12, %c0_13] : memref<64x64xf32, #tpu.memory_space<vmem>>, vector<64x64xf32>
    %cst_14 = arith.constant dense<0.000000e+00> : vector<8x64xf32>
    %40 = tpu.matmul %38, %39, %cst_14 {dimension_numbers = #tpu.dot_dimension_numbers<[1], [0], [0], [1], [0, 0, 1, 1], [], []>} : vector<8x64xf32>, vector<64x64xf32>, vector<8x64xf32> -> vector<8x64xf32>
    %41 = vector.broadcast %4 : vector<1x64xf32> to vector<8x64xf32>
    %42 = arith.addf %40, %41 : vector<8x64xf32>
    %cst_15 = arith.constant 0.000000e+00 : f32
    %43 = vector.broadcast %cst_15 : f32 to vector<8x64xf32>
    %44 = arith.maximumf %42, %43 : vector<8x64xf32>
    %cst_16 = arith.constant dense<0.000000e+00> : vector<64xf32>
    %45 = vector.multi_reduction <add>, %44, %cst_16 [0] : vector<8x64xf32> to vector<64xf32>
    %46 = vector.shape_cast %45 : vector<64xf32> to vector<1x64xf32>
    %cst_17 = arith.constant 1.250000e-01 : f32
    %47 = vector.broadcast %cst_17 : f32 to vector<1x64xf32>
    %48 = arith.mulf %46, %47 : vector<1x64xf32>
    %49 = arith.mulf %44, %44 : vector<8x64xf32>
    %cst_18 = arith.constant dense<0.000000e+00> : vector<64xf32>
    %50 = vector.multi_reduction <add>, %49, %cst_18 [0] : vector<8x64xf32> to vector<64xf32>
    %51 = vector.shape_cast %50 : vector<64xf32> to vector<1x64xf32>
    %cst_19 = arith.constant 1.250000e-01 : f32
    %52 = vector.broadcast %cst_19 : f32 to vector<1x64xf32>
    %53 = arith.mulf %51, %52 : vector<1x64xf32>
    %54 = arith.mulf %48, %48 : vector<1x64xf32>
    %55 = arith.subf %53, %54 : vector<1x64xf32>
    %cst_20 = arith.constant 0.000000e+00 : f32
    %56 = vector.broadcast %cst_20 : f32 to vector<1x64xf32>
    %57 = arith.maximumf %55, %56 : vector<1x64xf32>
    %cst_21 = arith.constant 9.99999974E-6 : f32
    %58 = vector.broadcast %cst_21 : f32 to vector<1x64xf32>
    %59 = arith.addf %57, %58 : vector<1x64xf32>
    %60 = math.rsqrt %59 : vector<1x64xf32>
    %61 = arith.mulf %60, %5 : vector<1x64xf32>
    %62 = vector.broadcast %48 : vector<1x64xf32> to vector<8x64xf32>
    %63 = arith.subf %44, %62 : vector<8x64xf32>
    %64 = vector.broadcast %61 : vector<1x64xf32> to vector<8x64xf32>
    %65 = arith.mulf %63, %64 : vector<8x64xf32>
    %66 = vector.broadcast %6 : vector<1x64xf32> to vector<8x64xf32>
    %67 = arith.addf %65, %66 : vector<8x64xf32>
    %c0_22 = arith.constant 0 : index
    %c0_23 = arith.constant 0 : index
    %68 = vector.load %arg3[%c0_22, %c0_23] : memref<64x64xf32, #tpu.memory_space<vmem>>, vector<64x64xf32>
    %cst_24 = arith.constant dense<0.000000e+00> : vector<8x64xf32>
    %69 = tpu.matmul %67, %68, %cst_24 {dimension_numbers = #tpu.dot_dimension_numbers<[1], [0], [0], [1], [0, 0, 1, 1], [], []>} : vector<8x64xf32>, vector<64x64xf32>, vector<8x64xf32> -> vector<8x64xf32>
    %70 = vector.broadcast %7 : vector<1x64xf32> to vector<8x64xf32>
    %71 = arith.addf %69, %70 : vector<8x64xf32>
    %cst_25 = arith.constant 0.000000e+00 : f32
    %72 = vector.broadcast %cst_25 : f32 to vector<8x64xf32>
    %73 = arith.maximumf %71, %72 : vector<8x64xf32>
    %c0_26 = arith.constant 0 : index
    %c0_27 = arith.constant 0 : index
    %74 = vector.load %arg4[%c0_26, %c0_27] : memref<64x128xf32, #tpu.memory_space<vmem>>, vector<64x128xf32>
    %cst_28 = arith.constant dense<0.000000e+00> : vector<8x128xf32>
    %75 = tpu.matmul %73, %74, %cst_28 {dimension_numbers = #tpu.dot_dimension_numbers<[1], [0], [0], [1], [0, 0, 1, 1], [], []>} : vector<8x64xf32>, vector<64x128xf32>, vector<8x128xf32> -> vector<8x128xf32>
    %76 = vector.broadcast %8 : vector<1x128xf32> to vector<8x128xf32>
    %77 = arith.addf %75, %76 : vector<8x128xf32>
    %c0_29 = arith.constant 0 : index
    %c0_30 = arith.constant 0 : index
    %78 = vector.load %arg6[%c0_29, %c0_30] : memref<8x128xf32, #tpu.memory_space<vmem>>, vector<8x128xf32>
    tpu.vector_store %arg6[%c0_29, %c0_30], %77 {strides = array<i32>} : memref<8x128xf32, #tpu.memory_space<vmem>>, vector<8x128xf32>,
    return
  }
}

</mosaic_0001>

<llo_original>
// kernel: tpu_custom_call.1
$region0: #{tpu_custom_call.1}
  #allocation0 [shape = 'u32[]', space=smem, size = 0x4, offset = 0x4, fixed_abs, tag = 'smem constant byte address 0x4 - core index']
  #allocation1 [shape = 'u32[72,128]{1,0:T(1,128)}', space=vmem, size = 0x9000, scoped, tag = 'internal scratch']
  %s0 = inlined_call_operand.hbm [shape: f32[8,8], index: 0, kind: input, shape index: {}]
  %s1 = inlined_call_operand.hbm [shape: f32[8,64], index: 1, kind: input, shape index: {}]
  %s2 = inlined_call_operand.hbm [shape: f32[64,64], index: 2, kind: input, shape index: {}]
  %s3 = inlined_call_operand.hbm [shape: f32[64,64], index: 3, kind: input, shape index: {}]
  %s4 = inlined_call_operand.hbm [shape: f32[64,128], index: 4, kind: input, shape index: {}]
  %s5 = inlined_call_operand.hbm [shape: f32[8,128], index: 5, kind: input, shape index: {}]
  %s6 = inlined_call_operand.hbm [shape: f32[8,128], index: 6, kind: output, shape index: {}]
  %s7 = sld [smem:[#allocation0]]
  $region58: #{tpu_custom_call.1} parent=0
    _
  %s9 = ssub.s32 1, %s7
  %s10 = scalar_select 0, %s9, %s7
  $region1: #{tpu_custom_call.1} parent=0
    #allocation2 [shape = 'u8[4096]{0}', space=vmem, size = 0x1000, scoped, tag = 'input window, operand 0, single buffered']
    #allocation3 [shape = 's32[1]{0}', space=sflag, size = 0x4, scoped, tag = 'scoped memory for tpu_custom_call.1']
    #allocation4 [shape = 's32[1]{0}', space=sflag, size = 0x4, scoped, tag = 'scoped memory for tpu_custom_call.1']
    #allocation5 [shape = 'u8[4096]{0}', space=vmem, size = 0x1000, scoped, tag = 'input window, operand 1, single buffered']
    #allocation6 [shape = 's32[1]{0}', space=sflag, size = 0x4, scoped, tag = 'scoped memory for tpu_custom_call.1']
    #allocation7 [shape = 'u8[32768]{0}', space=vmem, size = 0x8000, scoped, tag = 'input window, operand 2, single buffered']
    #allocation8 [shape = 'u8[32768]{0}', space=vmem, size = 0x8000, scoped, tag = 'input window, operand 3, single buffered']
    #allocation9 [shape = 's32[1]{0}', space=sflag, size = 0x4, scoped, tag = 'scoped memory for tpu_custom_call.1']
    #allocation10 [shape = 'u8[32768]{0}', space=vmem, size = 0x8000, scoped, tag = 'input window, operand 4, single buffered']
    #allocation11 [shape = 'u8[4096]{0}', space=vmem, size = 0x1000, scoped, tag = 'input window, operand 5, single buffered']
    #allocation12 [shape = 's32[1]{0}', space=sflag, size = 0x4, scoped, tag = 'scoped memory for tpu_custom_call.1']
    #allocation13 [shape = 'u8[4096]{0}', space=vmem, size = 0x1000, scoped, tag = 'output window, operand 0, single buffered']
    %11 = vsyncpa [#allocation3], 0
    %12 = vsyncpa [#allocation6], 0
    %13 = vsyncpa [#allocation9], 0
    %14 = vsyncpa [#allocation12], 0
    %15 = vsyncpa [#allocation4], 0
    // Predicated region
    $region2: #{tpu_custom_call.1} parent=1 // pred_check
      _
    $region3: #{tpu_custom_call.1} parent=1 // pred_check_branch
      %17 = sbr.rel (0) target = $region5
    $region4: #{tpu_custom_call.1} parent=1 // pred_region
      %19 = vsyncadd [#allocation3], 0
      %s21 = sshll.u32 %s0, 4
      %s22 = int_to_ptr.hbm [resolvable:$true] %s21
      %s23 = sshll.u32 [#allocation2], 4
      %s24 = int_to_ptr.vmem [resolvable:$true] %s23
      %26 = dma.hbm_to_vmem [thread:$0]  %s22, 128, %s24, [#allocation3]
    $region5: #{tpu_custom_call.1} parent=1 // pred_fallthru
      _
    // Predicated region
    $region6: #{tpu_custom_call.1} parent=1 // pred_check
      _
    $region7: #{tpu_custom_call.1} parent=1 // pred_check_branch
      %28 = sbr.rel (0) target = $region9
    $region8: #{tpu_custom_call.1} parent=1 // pred_region
      %30 = vsyncadd [#allocation6], 0
      %s32 = sshll.u32 %s1, 4
      %s33 = int_to_ptr.hbm [resolvable:$true] %s32
      %s34 = sshll.u32 [#allocation5], 4
      %s35 = int_to_ptr.vmem [resolvable:$true] %s34
      %37 = dma.hbm_to_vmem [thread:$0]  %s33, 128, %s35, [#allocation6]
    $region9: #{tpu_custom_call.1} parent=1 // pred_fallthru
      _
    // Predicated region
    $region10: #{tpu_custom_call.1} parent=1 // pred_check
      _
    $region11: #{tpu_custom_call.1} parent=1 // pred_check_branch
      %39 = sbr.rel (0) target = $region13
    $region12: #{tpu_custom_call.1} parent=1 // pred_region
      %41 = vsyncadd [#allocation6], 0
      %s42 = sshll.u32 %s2, 4
      %s43 = int_to_ptr.hbm [resolvable:$true] %s42
      %s44 = sshll.u32 [#allocation7], 4
      %s45 = int_to_ptr.vmem [resolvable:$true] %s44
      %50 = dma.hbm_to_vmem [thread:$0]  %s43, 1024, %s45, [#allocation6], 128, 128, 8
    $region13: #{tpu_custom_call.1} parent=1 // pred_fallthru
      _
    // Predicated region
    $region14: #{tpu_custom_call.1} parent=1 // pred_check
      _
    $region15: #{tpu_custom_call.1} parent=1 // pred_check_branch
      %52 = sbr.rel (0) target = $region17
    $region16: #{tpu_custom_call.1} parent=1 // pred_region
      %54 = vsyncadd [#allocation9], 0
      %s55 = sshll.u32 %s3, 4
      %s56 = int_to_ptr.hbm [resolvable:$true] %s55
      %s57 = sshll.u32 [#allocation8], 4
      %s58 = int_to_ptr.vmem [resolvable:$true] %s57
      %63 = dma.hbm_to_vmem [thread:$0]  %s56, 1024, %s58, [#allocation9], 128, 128, 8
    $region17: #{tpu_custom_call.1} parent=1 // pred_fallthru
      _
    // Predicated region
    $region18: #{tpu_custom_call.1} parent=1 // pred_check
      _
    $region19: #{tpu_custom_call.1} parent=1 // pred_check_branch
      %65 = sbr.rel (0) target = $region21
    $region20: #{tpu_custom_call.1} parent=1 // pred_region
      %67 = vsyncadd [#allocation9], 0
      %s68 = sshll.u32 %s4, 4
      %s69 = int_to_ptr.hbm [resolvable:$true] %s68
      %s70 = sshll.u32 [#allocation10], 4
      %s71 = int_to_ptr.vmem [resolvable:$true] %s70
      %76 = dma.hbm_to_vmem [thread:$0]  %s69, 1024, %s71, [#allocation9], 128, 128, 8
    $region21: #{tpu_custom_call.1} parent=1 // pred_fallthru
      _
    // Predicated region
    $region22: #{tpu_custom_call.1} parent=1 // pred_check
      _
    $region23: #{tpu_custom_call.1} parent=1 // pred_check_branch
      %78 = sbr.rel (0) target = $region25
    $region24: #{tpu_custom_call.1} parent=1 // pred_region
      %80 = vsyncadd [#allocation12], 0
      %s82 = sshll.u32 %s5, 4
      %s83 = int_to_ptr.hbm [resolvable:$true] %s82
      %s84 = sshll.u32 [#allocation11], 4
      %s85 = int_to_ptr.vmem [resolvable:$true] %s84
      %87 = dma.hbm_to_vmem [thread:$0]  %s83, 128, %s85, [#allocation12]
    $region25: #{tpu_custom_call.1} parent=1 // pred_fallthru
      _
    // Predicated region
    $region26: #{tpu_custom_call.1} parent=1 // pred_check
      _
    $region27: #{tpu_custom_call.1} parent=1 // pred_check_branch
      %89 = sbr.rel (0) target = $region29
    $region28: #{tpu_custom_call.1} parent=1 // pred_region
      %91 = dma.done [#allocation3], 128
    $region29: #{tpu_custom_call.1} parent=1 // pred_fallthru
      _
    // Predicated region
    $region30: #{tpu_custom_call.1} parent=1 // pred_check
      _
    $region31: #{tpu_custom_call.1} parent=1 // pred_check_branch
      %93 = sbr.rel (0) target = $region33
    $region32: #{tpu_custom_call.1} parent=1 // pred_region
      %95 = dma.done [#allocation6], 128
    $region33: #{tpu_custom_call.1} parent=1 // pred_fallthru
      _
    // Predicated region
    $region34: #{tpu_custom_call.1} parent=1 // pred_check
      _
    $region35: #{tpu_custom_call.1} parent=1 // pred_check_branch
      %97 = sbr.rel (0) target = $region37
    $region36: #{tpu_custom_call.1} parent=1 // pred_region
      %99 = dma.done [#allocation6], 1024
    $region37: #{tpu_custom_call.1} parent=1 // pred_fallthru
      _
    // Predicated region
    $region38: #{tpu_custom_call.1} parent=1 // pred_check
      _
    $region39: #{tpu_custom_call.1} parent=1 // pred_check_branch
      %101 = sbr.rel (0) target = $region41
    $region40: #{tpu_custom_call.1} parent=1 // pred_region
      %103 = dma.done [#allocation9], 1024
    $region41: #{tpu_custom_call.1} parent=1 // pred_fallthru
      _
    // Predicated region
    $region42: #{tpu_custom_call.1} parent=1 // pred_check
      _
    $region43: #{tpu_custom_call.1} parent=1 // pred_check_branch
      %105 = sbr.rel (0) target = $region45
    $region44: #{tpu_custom_call.1} parent=1 // pred_region
      %107 = dma.done [#allocation9], 1024
    $region45: #{tpu_custom_call.1} parent=1 // pred_fallthru
      _
    // Predicated region
    $region46: #{tpu_custom_call.1} parent=1 // pred_check
      _
    $region47: #{tpu_custom_call.1} parent=1 // pred_check_branch
      %109 = sbr.rel (0) target = $region49
    $region48: #{tpu_custom_call.1} parent=1 // pred_region
      %111 = dma.done [#allocation12], 128
    $region49: #{tpu_custom_call.1} parent=1 // pred_fallthru
      _
    %v112 = vld [vmem:[#allocation11] sm:$0xff]
    %v113 = vld [vmem:[#allocation2] sm:$0xff]
    %v114 = vld [vmem:[#allocation5] sm:$0xff]
    %v115 = vperm.slane %v112, 0
    %vm116 = vcmask 64512
    %v118 = vsel %vm116, %v113, 0
    %120 = vmatpush.msra.mxu0 0.0
    %121 = vmatpush.msra.mxu0 0.0
    %122 = vmatpush.msra.mxu0 0.0
    %123 = vmatpush.msra.mxu0 0.0
    %124 = vmatpush.msra.mxu0 0.0
    %125 = vmatpush.msra.mxu0 0.0
    %126 = vmatpush.msra.mxu0 0.0
    %127 = vmatpush.msra.mxu0 0.0
    %128 = vmatpush.msra.mxu0 0.0
    %129 = vmatpush.msra.mxu0 0.0
    %130 = vmatpush.msra.mxu0 0.0
    %131 = vmatpush.msra.mxu0 0.0
    %132 = vmatpush.msra.mxu0 0.0
    %133 = vmatpush.msra.mxu0 0.0
    %134 = vmatpush.msra.mxu0 0.0
    %135 = vmatpush.msra.mxu0 %v114
    %136 = vmatmul.f32.gmra.mxu0 %v118
    %v137 = vpop.f32.mrf.mxu0
    %v138 = vadd.f32 %v115, %v137
    %139 = vdwg.mxu0
    %v140 = vmax.f32 %v138, 0.0
    %vm141 = vcmask 523264
    %v142 = vsel %vm141, %v140, 0.0
    %v143 = vrot.slane %v142, 4
    %v144 = vadd.f32 %v142, %v143
    %v145 = vrot.slane %v144, 2
    %v146 = vadd.f32 %v144, %v145
    %v147 = vrot.slane %v146, 1
    %v148 = vadd.f32 %v146, %v147
    %v149 = vmul.f32 %v148, 0.125
    %v150 = vmul.f32 %v140, %v140
    %v151 = vsel %vm141, %v150, 0.0
    %v152 = vrot.slane %v151, 4
    %v153 = vadd.f32 %v151, %v152
    %v154 = vrot.slane %v153, 2
    %v155 = vadd.f32 %v153, %v154
    %v156 = vrot.slane %v155, 1
    %v157 = vadd.f32 %v155, %v156
    %v158 = vmul.f32 %v157, 0.125
    %v159 = vmul.f32 %v149, %v149
    %v160 = vsub.f32 %v158, %v159
    %v161 = vmax.f32 %v160, 0.0
    %v162 = vadd.f32 %v161, 1e-05
    %v163 = vrsqrt.pop %v162
    %v164 = vmul.f32 %v163, %v162
    %v165 = vmul.f32 %v164, %v163
    %v166 = vmul.f32 0.5, %v165
    %v167 = vsub.f32 1.5, %v166
    %v168 = vmul.f32 %v163, %v167
    %vm169 = vweird.f32 %v162
    %vm170 = vweird.f32 %v163
    %vm171 = vmor %vm169, %vm170
    %v172 = vsel %vm171, %v163, %v168
    %v173 = vmul.f32 %v172, %v112
    %v174 = vsub.f32 %v140, %v149
    %v175 = vperm.slane %v173, 1
    %v176 = vmul.f32 %v174, %v175
    %v177 = vperm.slane %v112, 2
    %v178 = vadd.f32 %v176, %v177
    %v179 = vld [vmem:[#allocation7] sm:$0xff]
    %v180 = vld [vmem:[#allocation7 + $0x8] sm:$0xff]
    %v181 = vld [vmem:[#allocation7 + $0x10] sm:$0xff]
    %v182 = vld [vmem:[#allocation7 + $0x18] sm:$0xff]
    %v183 = vld [vmem:[#allocation7 + $0x20] sm:$0xff]
    %v184 = vld [vmem:[#allocation7 + $0x28] sm:$0xff]
    %v185 = vld [vmem:[#allocation7 + $0x30] sm:$0xff]
    %v186 = vld [vmem:[#allocation7 + $0x38] sm:$0xff]
    %v187 = vperm.slane %v112, 3
    %v189 = vsel %vm141, %v178, 0
    %191 = vmatpush.msra.mxu0 0.0
    %192 = vmatpush.msra.mxu0 0.0
    %193 = vmatpush.msra.mxu0 0.0
    %194 = vmatpush.msra.mxu0 0.0
    %195 = vmatpush.msra.mxu0 0.0
    %196 = vmatpush.msra.mxu0 0.0
    %197 = vmatpush.msra.mxu0 0.0
    %198 = vmatpush.msra.mxu0 0.0
    %199 = vmatpush.msra.mxu0 %v186
    %200 = vmatpush.msra.mxu0 %v185
    %201 = vmatpush.msra.mxu0 %v184
    %202 = vmatpush.msra.mxu0 %v183
    %203 = vmatpush.msra.mxu0 %v182
    %204 = vmatpush.msra.mxu0 %v181
    %205 = vmatpush.msra.mxu0 %v180
    %206 = vmatpush.msra.mxu0 %v179
    %207 = vmatmul.f32.gmra.mxu0 %v189
    %v208 = vpop.f32.mrf.mxu0
    %v209 = vadd.f32 %v187, %v208
    %210 = vdwg.mxu0
    %v211 = vmax.f32 %v209, 0.0
    %v212 = vsel %vm141, %v211, 0.0
    %v213 = vrot.slane %v212, 4
    %v214 = vadd.f32 %v212, %v213
    %v215 = vrot.slane %v214, 2
    %v216 = vadd.f32 %v214, %v215
    %v217 = vrot.slane %v216, 1
    %v218 = vadd.f32 %v216, %v217
    %v219 = vmul.f32 %v218, 0.125
    %v220 = vmul.f32 %v211, %v211
    %v221 = vsel %vm141, %v220, 0.0
    %v222 = vrot.slane %v221, 4
    %v223 = vadd.f32 %v221, %v222
    %v224 = vrot.slane %v223, 2
    %v225 = vadd.f32 %v223, %v224
    %v226 = vrot.slane %v225, 1
    %v227 = vadd.f32 %v225, %v226
    %v228 = vmul.f32 %v227, 0.125
    %v229 = vmul.f32 %v219, %v219
    %v230 = vsub.f32 %v228, %v229
    %v231 = vmax.f32 %v230, 0.0
    %v232 = vadd.f32 %v231, 1e-05
    %v233 = vrsqrt.pop %v232
    %v234 = vmul.f32 %v233, %v232
    %v235 = vmul.f32 %v234, %v233
    %v236 = vmul.f32 0.5, %v235
    %v237 = vsub.f32 1.5, %v236
    %v238 = vmul.f32 %v233, %v237
    %vm239 = vweird.f32 %v232
    %vm240 = vweird.f32 %v233
    %vm241 = vmor %vm239, %vm240
    %v242 = vsel %vm241, %v233, %v238
    %v243 = vmul.f32 %v242, %v112
    %v244 = vsub.f32 %v211, %v219
    %v245 = vperm.slane %v243, 4
    %v246 = vmul.f32 %v244, %v245
    %v247 = vperm.slane %v112, 5
    %v248 = vadd.f32 %v246, %v247
    %v249 = vld [vmem:[#allocation8] sm:$0xff]
    %v250 = vld [vmem:[#allocation8 + $0x8] sm:$0xff]
    %v251 = vld [vmem:[#allocation8 + $0x10] sm:$0xff]
    %v252 = vld [vmem:[#allocation8 + $0x18] sm:$0xff]
    %v253 = vld [vmem:[#allocation8 + $0x20] sm:$0xff]
    %v254 = vld [vmem:[#allocation8 + $0x28] sm:$0xff]
    %v255 = vld [vmem:[#allocation8 + $0x30] sm:$0xff]
    %v256 = vld [vmem:[#allocation8 + $0x38] sm:$0xff]
    %v257 = vperm.slane %v112, 6
    %v259 = vsel %vm141, %v248, 0
    %261 = vmatpush.msra.mxu0 0.0
    %262 = vmatpush.msra.mxu0 0.0
    %263 = vmatpush.msra.mxu0 0.0
    %264 = vmatpush.msra.mxu0 0.0
    %265 = vmatpush.msra.mxu0 0.0
    %266 = vmatpush.msra.mxu0 0.0
    %267 = vmatpush.msra.mxu0 0.0
    %268 = vmatpush.msra.mxu0 0.0
    %269 = vmatpush.msra.mxu0 %v256
    %270 = vmatpush.msra.mxu0 %v255
    %271 = vmatpush.msra.mxu0 %v254
    %272 = vmatpush.msra.mxu0 %v253
    %273 = vmatpush.msra.mxu0 %v252
    %274 = vmatpush.msra.mxu0 %v251
    %275 = vmatpush.msra.mxu0 %v250
    %276 = vmatpush.msra.mxu0 %v249
    %277 = vmatmul.f32.gmra.mxu0 %v259
    %v278 = vpop.f32.mrf.mxu0
    %v279 = vadd.f32 %v257, %v278
    %280 = vdwg.mxu0
    %v281 = vmax.f32 %v279, 0.0
    %v282 = vld [vmem:[#allocation10] sm:$0xff]
    %v283 = vld [vmem:[#allocation10 + $0x8] sm:$0xff]
    %v284 = vld [vmem:[#allocation10 + $0x10] sm:$0xff]
    %v285 = vld [vmem:[#allocation10 + $0x18] sm:$0xff]
    %v286 = vld [vmem:[#allocation10 + $0x20] sm:$0xff]
    %v287 = vld [vmem:[#allocation10 + $0x28] sm:$0xff]
    %v288 = vld [vmem:[#allocation10 + $0x30] sm:$0xff]
    %v289 = vld [vmem:[#allocation10 + $0x38] sm:$0xff]
    %v290 = vperm.slane %v112, 7
    %v292 = vsel %vm141, %v281, 0
    %294 = vmatpush.msra.mxu0 0.0
    %295 = vmatpush.msra.mxu0 0.0
    %296 = vmatpush.msra.mxu0 0.0
    %297 = vmatpush.msra.mxu0 0.0
    %298 = vmatpush.msra.mxu0 0.0
    %299 = vmatpush.msra.mxu0 0.0
    %300 = vmatpush.msra.mxu0 0.0
    %301 = vmatpush.msra.mxu0 0.0
    %302 = vmatpush.msra.mxu0 %v289
    %303 = vmatpush.msra.mxu0 %v288
    %304 = vmatpush.msra.mxu0 %v287
    %305 = vmatpush.msra.mxu0 %v286
    %306 = vmatpush.msra.mxu0 %v285
    %307 = vmatpush.msra.mxu0 %v284
    %308 = vmatpush.msra.mxu0 %v283
    %309 = vmatpush.msra.mxu0 %v282
    %310 = vmatmul.f32.gmra.mxu0 %v292
    %v311 = vpop.f32.mrf.mxu0
    %v312 = vadd.f32 %v290, %v311
    %313 = vdwg.mxu0
    %314 = vst [vmem:[#allocation13] sm:$0xff] %v312
    // Predicated region
    $region50: #{tpu_custom_call.1} parent=1 // pred_check
      _
    $region51: #{tpu_custom_call.1} parent=1 // pred_check_branch
      %316 = sbr.rel (0) target = $region53
    $region52: #{tpu_custom_call.1} parent=1 // pred_region
      %318 = vsyncadd [#allocation4], 0
      %s320 = sshll.u32 [#allocation13], 4
      %s321 = int_to_ptr.vmem [resolvable:$true] %s320
      %s322 = sshll.u32 %s6, 4
      %s323 = int_to_ptr.hbm [resolvable:$true] %s322
      %325 = dma.vmem_to_hbm [thread:$0]  %s321, 128, %s323, [#allocation4]
    $region53: #{tpu_custom_call.1} parent=1 // pred_fallthru
      _
    // Predicated region
    $region54: #{tpu_custom_call.1} parent=1 // pred_check
      _
    $region55: #{tpu_custom_call.1} parent=1 // pred_check_branch
      %327 = sbr.rel (0) target = $region57
    $region56: #{tpu_custom_call.1} parent=1 // pred_region
      %329 = dma.done [#allocation4], 128
    $region57: #{tpu_custom_call.1} parent=1 // pred_fallthru
      _
    %330 = vsyncpa [#allocation3], 1
    %331 = vsyncpa [#allocation6], 1
    %332 = vsyncpa [#allocation9], 1
    %333 = vsyncpa [#allocation12], 1
    %334 = vsyncpa [#allocation4], 1

</llo_original>
